<compile_context>
chip_gen: v7x
topology: tpu7x:2x2x1
jax: 0.10.0
libtpu: 0.0.40
codegen_flags: <defaults>
</compile_context>

<pallas_src>
import math

import jax
import jax.numpy as jnp
from jax.experimental import pallas as pl
from jax.experimental.pallas import tpu as pltpu


def wnn_kernel(u_ref, w1_ref, b1_ref, w2_ref, b2_ref, w3_ref, b3_ref,
               w4_ref, b4_ref, out_ref):
    # Linear -> ReLU -> Linear -> ReLU -> Linear -> ReLU -> Linear(+scatter).
    # bf16 MXU operands, f32 accumulation, f32 bias adds, bf16 store.
    h = jnp.maximum(
        jnp.dot(u_ref[...], w1_ref[...],
                preferred_element_type=jnp.float32) + b1_ref[...], 0.0)
    h = jnp.maximum(
        jnp.dot(h.astype(jnp.bfloat16), w2_ref[...],
                preferred_element_type=jnp.float32) + b2_ref[...], 0.0)
    h = jnp.maximum(
        jnp.dot(h.astype(jnp.bfloat16), w3_ref[...],
                preferred_element_type=jnp.float32) + b3_ref[...], 0.0)
    # Last Linear already has the antisymmetric +/-1 scatter folded in; the
    # output tile is (tile, m*m) (or a lane-padded slab if requested).
    out_ref[...] = (
        jnp.dot(h.astype(jnp.bfloat16), w4_ref[...],
                preferred_element_type=jnp.float32) + b4_ref[...]
    ).astype(out_ref.dtype)


def make_scatter_matrix(m: int) -> jnp.ndarray:
    """(num_pairs, m*m) matrix implementing W[:, r, c] = +w, W[:, c, r] = -w."""
    rows, cols = jnp.triu_indices(m, k=1)
    num_pairs = m * (m - 1) // 2
    pair_idx = jnp.arange(num_pairs)
    scat = jnp.zeros((num_pairs, m * m), dtype=jnp.float32)
    scat = scat.at[pair_idx, rows * m + cols].set(1.0)
    scat = scat.at[pair_idx, cols * m + rows].set(-1.0)
    return scat


def init_linear(key, fan_in: int, fan_out: int):
    # Mimic torch.nn.Linear default init: U(-1/sqrt(fan_in), 1/sqrt(fan_in)).
    kw, kb = jax.random.split(key)
    bound = 1.0 / math.sqrt(fan_in)
    w = jax.random.uniform(kw, (fan_in, fan_out), jnp.float32, -bound, bound)
    b = jax.random.uniform(kb, (1, fan_out), jnp.float32, -bound, bound)
    return w, b


def prepare_wnn_params(params, manifold_dim: int, pad_output_lanes: bool = False):
    """One-time parameter preparation (call outside the hot loop and reuse).

    Folds the +/-1 scatter into the last Linear (columns for (i,j)/(j,i) are
    exact negations, so antisymmetry is preserved bit-exactly) and casts all
    matmul weights to bf16.  Biases stay f32.
    """
    (w1, b1), (w2, b2), (w3, b3), (w4, b4) = params
    mm = manifold_dim * manifold_dim
    scat = make_scatter_matrix(manifold_dim)
    w4f = w4 @ scat                                   # (128, m*m)
    b4f = b4 @ scat                                   # (1,   m*m)
    if pad_output_lanes:
        out_w = pl.cdiv(mm, 128) * 128
        w4f = jnp.pad(w4f, ((0, 0), (0, out_w - mm)))
        b4f = jnp.pad(b4f, ((0, 0), (0, out_w - mm)))
    return (w1.astype(jnp.bfloat16), b1,
            w2.astype(jnp.bfloat16), b2,
            w3.astype(jnp.bfloat16), b3,
            w4f.astype(jnp.bfloat16), b4f)


def _round_up(x: int, n: int) -> int:
    return ((x + n - 1) // n) * n


def _choose_batch_tile(B: int, batch_tile: int) -> int:
    """Sublane-aligned batch tile: <= batch_tile rows, minimal pad rows, and
    >=4 grid steps when the batch allows it (2 steps per v7x TensorCore)."""
    batch_tile = max(8, _round_up(batch_tile, 8))
    b8 = _round_up(max(B, 1), 8)
    if b8 < 4 * 8:
        return b8                                  # tiny batch: single step
    steps = max(pl.cdiv(b8, batch_tile), 4)        # keep >=4 grid steps
    return _round_up(pl.cdiv(b8, steps), 8)


def wnn_forward(u, prepared_params, manifold_dim: int, batch_tile: int = 2048):
    """Forward pass. Returns (B, m, m) antisymmetric matrices in bf16
    (upcast outside the kernel only if the caller needs f32)."""
    w1, b1, w2, b2, w3, b3, w4, b4 = prepared_params
    B, m = u.shape
    assert m == manifold_dim
    mm = manifold_dim * manifold_dim
    out_w = w4.shape[1]                # m*m, or lane-padded multiple of 128

    tile = _choose_batch_tile(B, batch_tile)
    Bp = pl.cdiv(B, tile) * tile
    # Input cast to bf16 host-side (conscious precision choice: every matmul
    # already runs on bf16 operands, and it halves input HBM traffic).
    u_p = jnp.pad(u, ((0, Bp - B), (0, 0))).astype(jnp.bfloat16)

    const = lambda a: pl.BlockSpec(a.shape, lambda i: (0, 0))

    weight_bytes = sum(int(x.size) * x.dtype.itemsize
                       for x in (w1, b1, w2, b2, w3, b3, w4, b4))
    cost = pl.CostEstimate(
        flops=2 * Bp * (m * 128 + 128 * 128 + 128 * 128 + 128 * out_w),
        transcendentals=0,
        bytes_accessed=Bp * (m * 2 + out_w * 2) + weight_bytes,
    )

    out_flat = pl.pallas_call(
        wnn_kernel,
        out_shape=jax.ShapeDtypeStruct((Bp, out_w), jnp.bfloat16),
        grid=(Bp // tile,),
        in_specs=[
            pl.BlockSpec((tile, m), lambda i: (i, 0)),
            const(w1), const(b1),
            const(w2), const(b2),
            const(w3), const(b3),
            const(w4), const(b4),
        ],
        out_specs=pl.BlockSpec((tile, out_w), lambda i: (i, 0)),
        compiler_params=pltpu.CompilerParams(
            dimension_semantics=("parallel",)),
        cost_estimate=cost,
    )(u_p, w1, b1, w2, b2, w3, b3, w4, b4)

    if Bp != B or out_w != mm:
        out_flat = out_flat[:B, :mm]
    return out_flat.reshape(B, manifold_dim, manifold_dim)


def wnn_forward_ref(u, params, manifold_dim: int):
    # Pure-JAX reference matching the PyTorch forward semantics (bf16 matmul
    # operands / f32 accumulation, explicit triu scatter into +/- entries).
    (w1, b1), (w2, b2), (w3, b3), (w4, b4) = params

    def mm(a, w):
        return jnp.dot(a.astype(jnp.bfloat16), w.astype(jnp.bfloat16),
                       preferred_element_type=jnp.float32)

    h = jnp.maximum(mm(u, w1) + b1, 0.0)
    h = jnp.maximum(mm(h, w2) + b2, 0.0)
    h = jnp.maximum(mm(h, w3) + b3, 0.0)
    w_arr = mm(h, w4) + b4                       # (B, m*(m-1)/2)
    rows, cols = jnp.triu_indices(manifold_dim, k=1)
    out = jnp.zeros((u.shape[0], manifold_dim, manifold_dim), jnp.float32)
    out = out.at[:, rows, cols].set(w_arr)
    out = out.at[:, cols, rows].set(-w_arr)
    return out


# TODO(synk): get_closeness_loss (vmap(jacrev) of the MLP + Jacobi-identity
# penalty) is not implemented as a Pallas kernel; only forward is translated.


if __name__ == "__main__":
    manifold_dim = 8
    batch = 16
    hidden = 128
    num_pairs = manifold_dim * (manifold_dim - 1) // 2

    root = jax.random.PRNGKey(0)
    k_u, k1, k2, k3, k4 = jax.random.split(root, 5)

    u = jax.random.normal(k_u, (batch, manifold_dim), dtype=jnp.float32)
    params = (
        init_linear(k1, manifold_dim, hidden),
        init_linear(k2, hidden, hidden),
        init_linear(k3, hidden, hidden),
        init_linear(k4, hidden, num_pairs),
    )

    prepared = prepare_wnn_params(params, manifold_dim)
    out = wnn_forward(u, prepared, manifold_dim)
    out = jax.block_until_ready(out)

    assert out.shape == (batch, manifold_dim, manifold_dim)
    out_f32 = out.astype(jnp.float32)

    ref = wnn_forward_ref(u, params, manifold_dim)
    assert jnp.allclose(out_f32, ref, atol=2e-2, rtol=2e-2), (
        float(jnp.max(jnp.abs(out_f32 - ref))))
    # Antisymmetry check (matches the PyTorch scatter semantics): W == -W^T.
    assert jnp.allclose(out_f32, -jnp.swapaxes(out_f32, 1, 2), atol=1e-6)

    print("KERNEL_OK")
</pallas_src>

<mosaic_0001>
module attributes {stable_mosaic.version = 11 : i64} {
  func.func @wnn_kernel(%arg0: i32, %arg1: memref<16x8xbf16, #tpu.memory_space<vmem>>, %arg2: memref<8x128xbf16, #tpu.memory_space<vmem>>, %arg3: memref<1x128xf32, #tpu.memory_space<vmem>>, %arg4: memref<128x128xbf16, #tpu.memory_space<vmem>>, %arg5: memref<1x128xf32, #tpu.memory_space<vmem>>, %arg6: memref<128x128xbf16, #tpu.memory_space<vmem>>, %arg7: memref<1x128xf32, #tpu.memory_space<vmem>>, %arg8: memref<128x64xbf16, #tpu.memory_space<vmem>>, %arg9: memref<1x64xf32, #tpu.memory_space<vmem>>, %arg10: memref<16x64xbf16, #tpu.memory_space<vmem>>) attributes {dimension_semantics = [#tpu.dimension_semantics<parallel>], iteration_bounds = array<i64: 1>, scalar_prefetch = 0 : i64, scratch_operands = 0 : i64, tpu.core_type = #tpu.core_type<tc>, window_params = [{transform_indices = @transform_0, window_bounds = array<i64: 16, 8>}, {pipeline_mode = #tpu.pipeline_mode<synchronous>, transform_indices = @transform_1, window_bounds = array<i64: 8, 128>}, {pipeline_mode = #tpu.pipeline_mode<synchronous>, transform_indices = @transform_2, window_bounds = array<i64: 1, 128>}, {pipeline_mode = #tpu.pipeline_mode<synchronous>, transform_indices = @transform_3, window_bounds = array<i64: 128, 128>}, {pipeline_mode = #tpu.pipeline_mode<synchronous>, transform_indices = @transform_4, window_bounds = array<i64: 1, 128>}, {pipeline_mode = #tpu.pipeline_mode<synchronous>, transform_indices = @transform_5, window_bounds = array<i64: 128, 128>}, {pipeline_mode = #tpu.pipeline_mode<synchronous>, transform_indices = @transform_6, window_bounds = array<i64: 1, 128>}, {pipeline_mode = #tpu.pipeline_mode<synchronous>, transform_indices = @transform_7, window_bounds = array<i64: 128, 64>}, {pipeline_mode = #tpu.pipeline_mode<synchronous>, transform_indices = @transform_8, window_bounds = array<i64: 1, 64>}, {transform_indices = @transform_9, window_bounds = array<i64: 16, 64>}]} {
    %c0 = arith.constant 0 : index
    %c0_0 = arith.constant 0 : index
    %0 = vector.load %arg1[%c0, %c0_0] : memref<16x8xbf16, #tpu.memory_space<vmem>>, vector<16x8xbf16>
    %c0_1 = arith.constant 0 : index
    %c0_2 = arith.constant 0 : index
    %1 = vector.load %arg2[%c0_1, %c0_2] : memref<8x128xbf16, #tpu.memory_space<vmem>>, vector<8x128xbf16>
    %cst = arith.constant dense<0.000000e+00> : vector<16x128xf32>
    %2 = tpu.matmul %0, %1, %cst {dimension_numbers = #tpu.dot_dimension_numbers<[1], [0], [0], [1], [0, 0, 1, 1], [], []>} : vector<16x8xbf16>, vector<8x128xbf16>, vector<16x128xf32> -> vector<16x128xf32>
    %c0_3 = arith.constant 0 : index
    %c0_4 = arith.constant 0 : index
    %3 = vector.load %arg3[%c0_3, %c0_4] : memref<1x128xf32, #tpu.memory_space<vmem>>, vector<1x128xf32>
    %4 = vector.broadcast %3 : vector<1x128xf32> to vector<16x128xf32>
    %5 = arith.addf %2, %4 : vector<16x128xf32>
    %cst_5 = arith.constant 0.000000e+00 : f32
    %6 = vector.broadcast %cst_5 : f32 to vector<16x128xf32>
    %7 = arith.maximumf %5, %6 : vector<16x128xf32>
    %8 = arith.truncf %7 : vector<16x128xf32> to vector<16x128xbf16>
    %c0_6 = arith.constant 0 : index
    %c0_7 = arith.constant 0 : index
    %9 = vector.load %arg4[%c0_6, %c0_7] : memref<128x128xbf16, #tpu.memory_space<vmem>>, vector<128x128xbf16>
    %cst_8 = arith.constant dense<0.000000e+00> : vector<16x128xf32>
    %10 = tpu.matmul %8, %9, %cst_8 {dimension_numbers = #tpu.dot_dimension_numbers<[1], [0], [0], [1], [0, 0, 1, 1], [], []>} : vector<16x128xbf16>, vector<128x128xbf16>, vector<16x128xf32> -> vector<16x128xf32>
    %c0_9 = arith.constant 0 : index
    %c0_10 = arith.constant 0 : index
    %11 = vector.load %arg5[%c0_9, %c0_10] : memref<1x128xf32, #tpu.memory_space<vmem>>, vector<1x128xf32>
    %12 = vector.broadcast %11 : vector<1x128xf32> to vector<16x128xf32>
    %13 = arith.addf %10, %12 : vector<16x128xf32>
    %cst_11 = arith.constant 0.000000e+00 : f32
    %14 = vector.broadcast %cst_11 : f32 to vector<16x128xf32>
    %15 = arith.maximumf %13, %14 : vector<16x128xf32>
    %16 = arith.truncf %15 : vector<16x128xf32> to vector<16x128xbf16>
    %c0_12 = arith.constant 0 : index
    %c0_13 = arith.constant 0 : index
    %17 = vector.load %arg6[%c0_12, %c0_13] : memref<128x128xbf16, #tpu.memory_space<vmem>>, vector<128x128xbf16>
    %cst_14 = arith.constant dense<0.000000e+00> : vector<16x128xf32>
    %18 = tpu.matmul %16, %17, %cst_14 {dimension_numbers = #tpu.dot_dimension_numbers<[1], [0], [0], [1], [0, 0, 1, 1], [], []>} : vector<16x128xbf16>, vector<128x128xbf16>, vector<16x128xf32> -> vector<16x128xf32>
    %c0_15 = arith.constant 0 : index
    %c0_16 = arith.constant 0 : index
    %19 = vector.load %arg7[%c0_15, %c0_16] : memref<1x128xf32, #tpu.memory_space<vmem>>, vector<1x128xf32>
    %20 = vector.broadcast %19 : vector<1x128xf32> to vector<16x128xf32>
    %21 = arith.addf %18, %20 : vector<16x128xf32>
    %cst_17 = arith.constant 0.000000e+00 : f32
    %22 = vector.broadcast %cst_17 : f32 to vector<16x128xf32>
    %23 = arith.maximumf %21, %22 : vector<16x128xf32>
    %24 = arith.truncf %23 : vector<16x128xf32> to vector<16x128xbf16>
    %c0_18 = arith.constant 0 : index
    %c0_19 = arith.constant 0 : index
    %25 = vector.load %arg8[%c0_18, %c0_19] : memref<128x64xbf16, #tpu.memory_space<vmem>>, vector<128x64xbf16>
    %cst_20 = arith.constant dense<0.000000e+00> : vector<16x64xf32>
    %26 = tpu.matmul %24, %25, %cst_20 {dimension_numbers = #tpu.dot_dimension_numbers<[1], [0], [0], [1], [0, 0, 1, 1], [], []>} : vector<16x128xbf16>, vector<128x64xbf16>, vector<16x64xf32> -> vector<16x64xf32>
    %c0_21 = arith.constant 0 : index
    %c0_22 = arith.constant 0 : index
    %27 = vector.load %arg9[%c0_21, %c0_22] : memref<1x64xf32, #tpu.memory_space<vmem>>, vector<1x64xf32>
    %28 = vector.broadcast %27 : vector<1x64xf32> to vector<16x64xf32>
    %29 = arith.addf %26, %28 : vector<16x64xf32>
    %30 = arith.truncf %29 : vector<16x64xf32> to vector<16x64xbf16>
    %c0_23 = arith.constant 0 : index
    %c0_24 = arith.constant 0 : index
    %31 = vector.load %arg10[%c0_23, %c0_24] : memref<16x64xbf16, #tpu.memory_space<vmem>>, vector<16x64xbf16>
    tpu.vector_store %arg10[%c0_23, %c0_24], %30 {strides = array<i32>} : memref<16x64xbf16, #tpu.memory_space<vmem>>, vector<16x64xbf16>,
    return
  }
  func.func @transform_0(%arg0: i32) -> (i32, i32) {
    %c0_i32 = arith.constant 0 : i32
    %c0_i32_0 = arith.constant 0 : i32
    return %arg0, %c0_i32 : i32, i32
  }
  func.func @transform_1(%arg0: i32) -> (i32, i32) {
    %c0_i32 = arith.constant 0 : i32
    %c0_i32_0 = arith.constant 0 : i32
    %c0_i32_1 = arith.constant 0 : i32
    return %c0_i32, %c0_i32_0 : i32, i32
  }
  func.func @transform_2(%arg0: i32) -> (i32, i32) {
    %c0_i32 = arith.constant 0 : i32
    %c0_i32_0 = arith.constant 0 : i32
    %c0_i32_1 = arith.constant 0 : i32
    return %c0_i32, %c0_i32_0 : i32, i32
  }
  func.func @transform_3(%arg0: i32) -> (i32, i32) {
    %c0_i32 = arith.constant 0 : i32
    %c0_i32_0 = arith.constant 0 : i32
    %c0_i32_1 = arith.constant 0 : i32
    return %c0_i32, %c0_i32_0 : i32, i32
  }
  func.func @transform_4(%arg0: i32) -> (i32, i32) {
    %c0_i32 = arith.constant 0 : i32
    %c0_i32_0 = arith.constant 0 : i32
    %c0_i32_1 = arith.constant 0 : i32
    return %c0_i32, %c0_i32_0 : i32, i32
  }
  func.func @transform_5(%arg0: i32) -> (i32, i32) {
    %c0_i32 = arith.constant 0 : i32
    %c0_i32_0 = arith.constant 0 : i32
    %c0_i32_1 = arith.constant 0 : i32
    return %c0_i32, %c0_i32_0 : i32, i32
  }
  func.func @transform_6(%arg0: i32) -> (i32, i32) {
    %c0_i32 = arith.constant 0 : i32
    %c0_i32_0 = arith.constant 0 : i32
    %c0_i32_1 = arith.constant 0 : i32
    return %c0_i32, %c0_i32_0 : i32, i32
  }
  func.func @transform_7(%arg0: i32) -> (i32, i32) {
    %c0_i32 = arith.constant 0 : i32
    %c0_i32_0 = arith.constant 0 : i32
    %c0_i32_1 = arith.constant 0 : i32
    return %c0_i32, %c0_i32_0 : i32, i32
  }
  func.func @transform_8(%arg0: i32) -> (i32, i32) {
    %c0_i32 = arith.constant 0 : i32
    %c0_i32_0 = arith.constant 0 : i32
    %c0_i32_1 = arith.constant 0 : i32
    return %c0_i32, %c0_i32_0 : i32, i32
  }
  func.func @transform_9(%arg0: i32) -> (i32, i32) {
    %c0_i32 = arith.constant 0 : i32
    %c0_i32_0 = arith.constant 0 : i32
    return %arg0, %c0_i32 : i32, i32
  }
}

</mosaic_0001>

<llo_original>
// kernel: tpu_custom_call.1
$region0: #{tpu_custom_call.1}
  #allocation0 [shape = 'u32[]', space=smem, size = 0x4, offset = 0x4, fixed_abs, tag = 'smem constant byte address 0x4 - core index']
  #allocation1 [shape = 'u32[144,128]{1,0:T(1,128)}', space=vmem, size = 0x12000, scoped, tag = 'internal scratch']
  %s0 = inlined_call_operand.vmem [shape: bf16[16,8], index: 0, kind: input, shape index: {}]
  %s1 = inlined_call_operand.vmem [shape: bf16[8,128], index: 1, kind: input, shape index: {}]
  %s2 = inlined_call_operand.vmem [shape: f32[1,128], index: 2, kind: input, shape index: {}]
  %s3 = inlined_call_operand.vmem [shape: bf16[128,128], index: 3, kind: input, shape index: {}]
  %s4 = inlined_call_operand.vmem [shape: f32[1,128], index: 4, kind: input, shape index: {}]
  %s5 = inlined_call_operand.hbm [shape: bf16[128,128], index: 5, kind: input, shape index: {}]
  %s6 = inlined_call_operand.vmem [shape: f32[1,128], index: 6, kind: input, shape index: {}]
  %s7 = inlined_call_operand.vmem [shape: bf16[128,64], index: 7, kind: input, shape index: {}]
  %s8 = inlined_call_operand.vmem [shape: f32[1,64], index: 8, kind: input, shape index: {}]
  %s9 = inlined_call_operand.hbm [shape: bf16[16,64], index: 9, kind: output, shape index: {}]
  %s10 = sld [smem:[#allocation0]]
  $region50: #{tpu_custom_call.1} parent=0
    _
  %s12 = ssub.s32 1, %s10
  %s13 = scalar_select 0, %s12, %s10
  $region1: #{tpu_custom_call.1} parent=0
    #allocation2 [shape = 'u8[32768]{0}', space=vmem, size = 0x8000, scoped, tag = 'input window, operand 5, single buffered']
    #allocation3 [shape = 's32[1]{0}', space=sflag, size = 0x4, scoped, tag = 'scoped memory for tpu_custom_call.1']
    #allocation4 [shape = 's32[1]{0}', space=sflag, size = 0x4, scoped, tag = 'scoped memory for tpu_custom_call.1']
    #allocation5 [shape = 'u8[4096]{0}', space=vmem, size = 0x1000, scoped, tag = 'output window, operand 0, single buffered']
    %14 = vsyncpa [#allocation3], 0
    %15 = vsyncpa [#allocation4], 0
    // Predicated region
    $region2: #{tpu_custom_call.1} parent=1 // pred_check
      _
    $region3: #{tpu_custom_call.1} parent=1 // pred_check_branch
      %17 = sbr.rel (0) target = $region5
    $region4: #{tpu_custom_call.1} parent=1 // pred_region
      _
    $region5: #{tpu_custom_call.1} parent=1 // pred_fallthru
      _
    // Predicated region
    $region6: #{tpu_custom_call.1} parent=1 // pred_check
      _
    $region7: #{tpu_custom_call.1} parent=1 // pred_check_branch
      %19 = sbr.rel (0) target = $region9
    $region8: #{tpu_custom_call.1} parent=1 // pred_region
      _
    $region9: #{tpu_custom_call.1} parent=1 // pred_fallthru
      _
    // Predicated region
    $region10: #{tpu_custom_call.1} parent=1 // pred_check
      _
    $region11: #{tpu_custom_call.1} parent=1 // pred_check_branch
      %21 = sbr.rel (0) target = $region13
    $region12: #{tpu_custom_call.1} parent=1 // pred_region
      _
    $region13: #{tpu_custom_call.1} parent=1 // pred_fallthru
      _
    // Predicated region
    $region14: #{tpu_custom_call.1} parent=1 // pred_check
      _
    $region15: #{tpu_custom_call.1} parent=1 // pred_check_branch
      %23 = sbr.rel (0) target = $region17
    $region16: #{tpu_custom_call.1} parent=1 // pred_region
      _
    $region17: #{tpu_custom_call.1} parent=1 // pred_fallthru
      _
    // Predicated region
    $region18: #{tpu_custom_call.1} parent=1 // pred_check
      _
    $region19: #{tpu_custom_call.1} parent=1 // pred_check_branch
      %25 = sbr.rel (0) target = $region21
    $region20: #{tpu_custom_call.1} parent=1 // pred_region
      _
    $region21: #{tpu_custom_call.1} parent=1 // pred_fallthru
      _
    // Predicated region
    $region22: #{tpu_custom_call.1} parent=1 // pred_check
      _
    $region23: #{tpu_custom_call.1} parent=1 // pred_check_branch
      %27 = sbr.rel (0) target = $region25
    $region24: #{tpu_custom_call.1} parent=1 // pred_region
      %s29 = ssub.s32 1024, 1024
      %30 = vsyncadd [#allocation3], %s29
      %s31 = sshll.u32 [#allocation2], 4
      %s32 = int_to_ptr.vmem [resolvable:$true] %s31
      %37 = dma.hbm_to_vmem [thread:$0]  %s5, 1024, %s32, [#allocation3], 64, 64, 4
    $region25: #{tpu_custom_call.1} parent=1 // pred_fallthru
      _
    // Predicated region
    $region26: #{tpu_custom_call.1} parent=1 // pred_check
      _
    $region27: #{tpu_custom_call.1} parent=1 // pred_check_branch
      %39 = sbr.rel (0) target = $region29
    $region28: #{tpu_custom_call.1} parent=1 // pred_region
      _
    $region29: #{tpu_custom_call.1} parent=1 // pred_fallthru
      _
    // Predicated region
    $region30: #{tpu_custom_call.1} parent=1 // pred_check
      _
    $region31: #{tpu_custom_call.1} parent=1 // pred_check_branch
      %41 = sbr.rel (0) target = $region33
    $region32: #{tpu_custom_call.1} parent=1 // pred_region
      _
    $region33: #{tpu_custom_call.1} parent=1 // pred_fallthru
      _
    // Predicated region
    $region34: #{tpu_custom_call.1} parent=1 // pred_check
      _
    $region35: #{tpu_custom_call.1} parent=1 // pred_check_branch
      %43 = sbr.rel (0) target = $region37
    $region36: #{tpu_custom_call.1} parent=1 // pred_region
      _
    $region37: #{tpu_custom_call.1} parent=1 // pred_fallthru
      _
    // Predicated region
    $region38: #{tpu_custom_call.1} parent=1 // pred_check
      _
    $region39: #{tpu_custom_call.1} parent=1 // pred_check_branch
      %45 = sbr.rel (0) target = $region41
    $region40: #{tpu_custom_call.1} parent=1 // pred_region
      %46 = dma.done [#allocation3], 1024
    $region41: #{tpu_custom_call.1} parent=1 // pred_fallthru
      _
    %v48 = vld [vmem:[%s0] sm:$0xf]
    %v49 = vld [vmem:[%s0 + $0x4] sm:$0xf]
    %v50 = vld [vmem:[%s1] sm:$0xf]
    %v51 = vld [vmem:[%s2] sm:$0x1]
    %v53 = vlaneseq
    %v54 = vshrl.u32 %v53, 7
    %v55 = vsub.s32 0, %v54
    %v56 = vrot.slane %v51, %v55
    %v60 = vunpack.c.l.b16 %v48
    %v61 = vunpack.c.l.b16 %v49
    %v62 = vpack.c.b16 %v61, %v60
    %vm63 = vcmask 64512
    %v65 = vsel %vm63, %v62, 0
    %vm67 = vcmask 1043456
    %v69 = vsel %vm67, %v50, 0
    %71 = vmatprep.subr.bf16.mxu0 0
    %72 = vmatpush1.bf16.msra.mxu0 %v69
    %73 = vmatprep.subr.bf16.mxu0 0
    %74 = vmatpush1.bf16.msra.mxu0 0
    %75 = vmatprep.subr.bf16.mxu0 0
    %76 = vmatpush1.bf16.msra.mxu0 0
    %77 = vmatprep.subr.bf16.mxu0 0
    %78 = vmatpush1.bf16.msra.mxu0 0
    %79 = vmatprep.subr.bf16.mxu0 0
    %80 = vmatpush1.bf16.msra.mxu0 0
    %81 = vmatprep.subr.bf16.mxu0 0
    %82 = vmatpush1.bf16.msra.mxu0 0
    %83 = vmatprep.subr.bf16.mxu0 0
    %84 = vmatpush1.bf16.msra.mxu0 0
    %85 = vmatprep.subr.bf16.mxu0 0
    %86 = vmatpush1.bf16.msra.mxu0 0
    %87 = vmatprep.subr.bf16.mxu0 0
    %88 = vmatpush1.bf16.msra.mxu0 0
    %89 = vmatprep.subr.bf16.mxu0 0
    %90 = vmatpush1.bf16.msra.mxu0 0
    %91 = vmatprep.subr.bf16.mxu0 0
    %92 = vmatpush1.bf16.msra.mxu0 0
    %93 = vmatprep.subr.bf16.mxu0 0
    %94 = vmatpush1.bf16.msra.mxu0 0
    %95 = vmatprep.subr.bf16.mxu0 0
    %96 = vmatpush1.bf16.msra.mxu0 0
    %97 = vmatprep.subr.bf16.mxu0 0
    %98 = vmatpush1.bf16.msra.mxu0 0
    %99 = vmatprep.subr.bf16.mxu0 0
    %100 = vmatpush1.bf16.msra.mxu0 0
    %101 = vmatprep.subr.bf16.mxu0 0
    %102 = vmatpush1.bf16.msra.mxu0 0
    %103 = vmatprep.mubr.bf16.mxu0 0
    %104 = vmatmul.mubr.bf16.gmra.mrb[0].mxu0 %v65
    %v105 = vpop.f32.mrb[0].mxu0
    %v106 = vadd.f32 %v56, %v105
    %v107 = vpop.f32.mrb[0].mxu0
    %v108 = vpop.f32.mrb[0].mxu0
    %v109 = vadd.f32 %v56, %v108
    %v110 = vpop.f32.mrb[0].mxu0
    %111 = vdwg.mxu0
    %v112 = vmax.f32 %v106, 0.0
    %v113 = vmax.f32 %v109, 0.0
    %v114 = vpack.c.bf16 %v113, %v112
    %v115 = vld [vmem:[%s3] sm:$0xf]
    %v116 = vld [vmem:[%s3 + $0x4] sm:$0xf]
    %v117 = vld [vmem:[%s3 + $0x8] sm:$0xf]
    %v118 = vld [vmem:[%s3 + $0xc] sm:$0xf]
    %v119 = vld [vmem:[%s3 + $0x10] sm:$0xf]
    %v120 = vld [vmem:[%s3 + $0x14] sm:$0xf]
    %v121 = vld [vmem:[%s3 + $0x18] sm:$0xf]
    %v122 = vld [vmem:[%s3 + $0x1c] sm:$0xf]
    %v123 = vld [vmem:[%s3 + $0x20] sm:$0xf]
    %v124 = vld [vmem:[%s3 + $0x24] sm:$0xf]
    %v125 = vld [vmem:[%s3 + $0x28] sm:$0xf]
    %v126 = vld [vmem:[%s3 + $0x2c] sm:$0xf]
    %v127 = vld [vmem:[%s3 + $0x30] sm:$0xf]
    %v128 = vld [vmem:[%s3 + $0x34] sm:$0xf]
    %v129 = vld [vmem:[%s3 + $0x38] sm:$0xf]
    %v130 = vld [vmem:[%s3 + $0x3c] sm:$0xf]
    %v131 = vld [vmem:[%s4] sm:$0x1]
    %v133 = vlaneseq
    %v134 = vshrl.u32 %v133, 7
    %v135 = vsub.s32 0, %v134
    %v136 = vrot.slane %v131, %v135
    %v154 = vunpack.c.l.b16 %v115
    %v155 = vunpack.c.l.b16 %v116
    %v156 = vunpack.c.l.b16 %v117
    %v157 = vunpack.c.l.b16 %v118
    %v158 = vunpack.c.l.b16 %v119
    %v159 = vunpack.c.l.b16 %v120
    %v160 = vunpack.c.l.b16 %v121
    %v161 = vunpack.c.l.b16 %v122
    %v162 = vunpack.c.l.b16 %v123
    %v163 = vunpack.c.l.b16 %v124
    %v164 = vunpack.c.l.b16 %v125
    %v165 = vunpack.c.l.b16 %v126
    %v166 = vunpack.c.l.b16 %v127
    %v167 = vunpack.c.l.b16 %v128
    %v168 = vunpack.c.l.b16 %v129
    %v169 = vunpack.c.l.b16 %v130
    %v170 = vpack.c.b16 %v155, %v154
    %v171 = vpack.c.b16 %v157, %v156
    %v172 = vpack.c.b16 %v159, %v158
    %v173 = vpack.c.b16 %v161, %v160
    %v174 = vpack.c.b16 %v163, %v162
    %v175 = vpack.c.b16 %v165, %v164
    %v176 = vpack.c.b16 %v167, %v166
    %v177 = vpack.c.b16 %v169, %v168
    %186 = vmatprep.subr.bf16.mxu0 0
    %187 = vmatpush1.bf16.msra.mxu0 %v170
    %188 = vmatprep.subr.bf16.mxu0 0
    %189 = vmatpush1.bf16.msra.mxu0 %v171
    %190 = vmatprep.subr.bf16.mxu0 0
    %191 = vmatpush1.bf16.msra.mxu0 %v172
    %192 = vmatprep.subr.bf16.mxu0 0
    %193 = vmatpush1.bf16.msra.mxu0 %v173
    %194 = vmatprep.subr.bf16.mxu0 0
    %195 = vmatpush1.bf16.msra.mxu0 %v174
    %196 = vmatprep.subr.bf16.mxu0 0
    %197 = vmatpush1.bf16.msra.mxu0 %v175
    %198 = vmatprep.subr.bf16.mxu0 0
    %199 = vmatpush1.bf16.msra.mxu0 %v176
    %200 = vmatprep.subr.bf16.mxu0 0
    %201 = vmatpush1.bf16.msra.mxu0 %v177
    %202 = vmatprep.subr.bf16.mxu0 0
    %203 = vmatpush1.bf16.msra.mxu0 0
    %204 = vmatprep.subr.bf16.mxu0 0
    %205 = vmatpush1.bf16.msra.mxu0 0
    %206 = vmatprep.subr.bf16.mxu0 0
    %207 = vmatpush1.bf16.msra.mxu0 0
    %208 = vmatprep.subr.bf16.mxu0 0
    %209 = vmatpush1.bf16.msra.mxu0 0
    %210 = vmatprep.subr.bf16.mxu0 0
    %211 = vmatpush1.bf16.msra.mxu0 0
    %212 = vmatprep.subr.bf16.mxu0 0
    %213 = vmatpush1.bf16.msra.mxu0 0
    %214 = vmatprep.subr.bf16.mxu0 0
    %215 = vmatpush1.bf16.msra.mxu0 0
    %216 = vmatprep.subr.bf16.mxu0 0
    %217 = vmatpush1.bf16.msra.mxu0 0
    %218 = vmatprep.mubr.bf16.mxu0 0
    %219 = vmatmul.mubr.bf16.gmra.mrb[0].mxu0 %v114
    %v220 = vpop.f32.mrb[0].mxu0
    %v221 = vadd.f32 %v136, %v220
    %v222 = vpop.f32.mrb[0].mxu0
    %v223 = vpop.f32.mrb[0].mxu0
    %v224 = vadd.f32 %v136, %v223
    %v225 = vpop.f32.mrb[0].mxu0
    %226 = vdwg.mxu0
    %v227 = vmax.f32 %v221, 0.0
    %v228 = vmax.f32 %v224, 0.0
    %v229 = vpack.c.bf16 %v228, %v227
    %v230 = vld [vmem:[#allocation2] sm:$0xf]
    %v231 = vld [vmem:[#allocation2 + $0x4] sm:$0xf]
    %v232 = vld [vmem:[#allocation2 + $0x8] sm:$0xf]
    %v233 = vld [vmem:[#allocation2 + $0xc] sm:$0xf]
    %v234 = vld [vmem:[#allocation2 + $0x10] sm:$0xf]
    %v235 = vld [vmem:[#allocation2 + $0x14] sm:$0xf]
    %v236 = vld [vmem:[#allocation2 + $0x18] sm:$0xf]
    %v237 = vld [vmem:[#allocation2 + $0x1c] sm:$0xf]
    %v238 = vld [vmem:[#allocation2 + $0x20] sm:$0xf]
    %v239 = vld [vmem:[#allocation2 + $0x24] sm:$0xf]
    %v240 = vld [vmem:[#allocation2 + $0x28] sm:$0xf]
    %v241 = vld [vmem:[#allocation2 + $0x2c] sm:$0xf]
    %v242 = vld [vmem:[#allocation2 + $0x30] sm:$0xf]
    %v243 = vld [vmem:[#allocation2 + $0x34] sm:$0xf]
    %v244 = vld [vmem:[#allocation2 + $0x38] sm:$0xf]
    %v245 = vld [vmem:[#allocation2 + $0x3c] sm:$0xf]
    %v246 = vld [vmem:[%s6] sm:$0x1]
    %v248 = vlaneseq
    %v249 = vshrl.u32 %v248, 7
    %v250 = vsub.s32 0, %v249
    %v251 = vrot.slane %v246, %v250
    %v269 = vunpack.c.l.b16 %v230
    %v270 = vunpack.c.l.b16 %v231
    %v271 = vunpack.c.l.b16 %v232
    %v272 = vunpack.c.l.b16 %v233
    %v273 = vunpack.c.l.b16 %v234
    %v274 = vunpack.c.l.b16 %v235
    %v275 = vunpack.c.l.b16 %v236
    %v276 = vunpack.c.l.b16 %v237
    %v277 = vunpack.c.l.b16 %v238
    %v278 = vunpack.c.l.b16 %v239
    %v279 = vunpack.c.l.b16 %v240
    %v280 = vunpack.c.l.b16 %v241
    %v281 = vunpack.c.l.b16 %v242
    %v282 = vunpack.c.l.b16 %v243
    %v283 = vunpack.c.l.b16 %v244
    %v284 = vunpack.c.l.b16 %v245
    %v285 = vpack.c.b16 %v270, %v269
    %v286 = vpack.c.b16 %v272, %v271
    %v287 = vpack.c.b16 %v274, %v273
    %v288 = vpack.c.b16 %v276, %v275
    %v289 = vpack.c.b16 %v278, %v277
    %v290 = vpack.c.b16 %v280, %v279
    %v291 = vpack.c.b16 %v282, %v281
    %v292 = vpack.c.b16 %v284, %v283
    %301 = vmatprep.subr.bf16.mxu0 0
    %302 = vmatpush1.bf16.msra.mxu0 %v285
    %303 = vmatprep.subr.bf16.mxu0 0
    %304 = vmatpush1.bf16.msra.mxu0 %v286
    %305 = vmatprep.subr.bf16.mxu0 0
    %306 = vmatpush1.bf16.msra.mxu0 %v287
    %307 = vmatprep.subr.bf16.mxu0 0
    %308 = vmatpush1.bf16.msra.mxu0 %v288
    %309 = vmatprep.subr.bf16.mxu0 0
    %310 = vmatpush1.bf16.msra.mxu0 %v289
    %311 = vmatprep.subr.bf16.mxu0 0
    %312 = vmatpush1.bf16.msra.mxu0 %v290
    %313 = vmatprep.subr.bf16.mxu0 0
    %314 = vmatpush1.bf16.msra.mxu0 %v291
    %315 = vmatprep.subr.bf16.mxu0 0
    %316 = vmatpush1.bf16.msra.mxu0 %v292
    %317 = vmatprep.subr.bf16.mxu0 0
    %318 = vmatpush1.bf16.msra.mxu0 0
    %319 = vmatprep.subr.bf16.mxu0 0
    %320 = vmatpush1.bf16.msra.mxu0 0
    %321 = vmatprep.subr.bf16.mxu0 0
    %322 = vmatpush1.bf16.msra.mxu0 0
    %323 = vmatprep.subr.bf16.mxu0 0
    %324 = vmatpush1.bf16.msra.mxu0 0
    %325 = vmatprep.subr.bf16.mxu0 0
    %326 = vmatpush1.bf16.msra.mxu0 0
    %327 = vmatprep.subr.bf16.mxu0 0
    %328 = vmatpush1.bf16.msra.mxu0 0
    %329 = vmatprep.subr.bf16.mxu0 0
    %330 = vmatpush1.bf16.msra.mxu0 0
    %331 = vmatprep.subr.bf16.mxu0 0
    %332 = vmatpush1.bf16.msra.mxu0 0
    %333 = vmatprep.mubr.bf16.mxu0 0
    %334 = vmatmul.mubr.bf16.gmra.mrb[0].mxu0 %v229
    %v335 = vpop.f32.mrb[0].mxu0
    %v336 = vadd.f32 %v251, %v335
    %v337 = vpop.f32.mrb[0].mxu0
    %v338 = vpop.f32.mrb[0].mxu0
    %v339 = vadd.f32 %v251, %v338
    %v340 = vpop.f32.mrb[0].mxu0
    %341 = vdwg.mxu0
    %v342 = vmax.f32 %v336, 0.0
    %v343 = vmax.f32 %v339, 0.0
    %v344 = vpack.c.bf16 %v343, %v342
    %v345 = vld [vmem:[%s7] sm:$0xf]
    %v346 = vld [vmem:[%s7 + $0x4] sm:$0xf]
    %v347 = vld [vmem:[%s7 + $0x8] sm:$0xf]
    %v348 = vld [vmem:[%s7 + $0xc] sm:$0xf]
    %v349 = vld [vmem:[%s7 + $0x10] sm:$0xf]
    %v350 = vld [vmem:[%s7 + $0x14] sm:$0xf]
    %v351 = vld [vmem:[%s7 + $0x18] sm:$0xf]
    %v352 = vld [vmem:[%s7 + $0x1c] sm:$0xf]
    %v353 = vld [vmem:[%s7 + $0x20] sm:$0xf]
    %v354 = vld [vmem:[%s7 + $0x24] sm:$0xf]
    %v355 = vld [vmem:[%s7 + $0x28] sm:$0xf]
    %v356 = vld [vmem:[%s7 + $0x2c] sm:$0xf]
    %v357 = vld [vmem:[%s7 + $0x30] sm:$0xf]
    %v358 = vld [vmem:[%s7 + $0x34] sm:$0xf]
    %v359 = vld [vmem:[%s7 + $0x38] sm:$0xf]
    %v360 = vld [vmem:[%s7 + $0x3c] sm:$0xf]
    %v361 = vld [vmem:[%s8] sm:$0x1]
    %v363 = vlaneseq
    %v364 = vshrl.u32 %v363, 7
    %v365 = vsub.s32 0, %v364
    %v366 = vrot.slane %v361, %v365
    %v384 = vunpack.c.l.b16 %v345
    %v385 = vunpack.c.l.b16 %v346
    %v386 = vunpack.c.l.b16 %v347
    %v387 = vunpack.c.l.b16 %v348
    %v388 = vunpack.c.l.b16 %v349
    %v389 = vunpack.c.l.b16 %v350
    %v390 = vunpack.c.l.b16 %v351
    %v391 = vunpack.c.l.b16 %v352
    %v392 = vunpack.c.l.b16 %v353
    %v393 = vunpack.c.l.b16 %v354
    %v394 = vunpack.c.l.b16 %v355
    %v395 = vunpack.c.l.b16 %v356
    %v396 = vunpack.c.l.b16 %v357
    %v397 = vunpack.c.l.b16 %v358
    %v398 = vunpack.c.l.b16 %v359
    %v399 = vunpack.c.l.b16 %v360
    %v400 = vpack.c.b16 %v385, %v384
    %v401 = vpack.c.b16 %v387, %v386
    %v402 = vpack.c.b16 %v389, %v388
    %v403 = vpack.c.b16 %v391, %v390
    %v404 = vpack.c.b16 %v393, %v392
    %v405 = vpack.c.b16 %v395, %v394
    %v406 = vpack.c.b16 %v397, %v396
    %v407 = vpack.c.b16 %v399, %v398
    %416 = vmatprep.subr.bf16.mxu0 0
    %417 = vmatpush1.bf16.msra.mxu0 %v400
    %418 = vmatprep.subr.bf16.mxu0 0
    %419 = vmatpush1.bf16.msra.mxu0 %v401
    %420 = vmatprep.subr.bf16.mxu0 0
    %421 = vmatpush1.bf16.msra.mxu0 %v402
    %422 = vmatprep.subr.bf16.mxu0 0
    %423 = vmatpush1.bf16.msra.mxu0 %v403
    %424 = vmatprep.subr.bf16.mxu0 0
    %425 = vmatpush1.bf16.msra.mxu0 %v404
    %426 = vmatprep.subr.bf16.mxu0 0
    %427 = vmatpush1.bf16.msra.mxu0 %v405
    %428 = vmatprep.subr.bf16.mxu0 0
    %429 = vmatpush1.bf16.msra.mxu0 %v406
    %430 = vmatprep.subr.bf16.mxu0 0
    %431 = vmatpush1.bf16.msra.mxu0 %v407
    %432 = vmatprep.subr.bf16.mxu0 0
    %433 = vmatpush1.bf16.msra.mxu0 0
    %434 = vmatprep.subr.bf16.mxu0 0
    %435 = vmatpush1.bf16.msra.mxu0 0
    %436 = vmatprep.subr.bf16.mxu0 0
    %437 = vmatpush1.bf16.msra.mxu0 0
    %438 = vmatprep.subr.bf16.mxu0 0
    %439 = vmatpush1.bf16.msra.mxu0 0
    %440 = vmatprep.subr.bf16.mxu0 0
    %441 = vmatpush1.bf16.msra.mxu0 0
    %442 = vmatprep.subr.bf16.mxu0 0
    %443 = vmatpush1.bf16.msra.mxu0 0
    %444 = vmatprep.subr.bf16.mxu0 0
    %445 = vmatpush1.bf16.msra.mxu0 0
    %446 = vmatprep.subr.bf16.mxu0 0
    %447 = vmatpush1.bf16.msra.mxu0 0
    %448 = vmatprep.mubr.bf16.mxu0 0
    %449 = vmatmul.mubr.bf16.gmra.mrb[0].mxu0 %v344
    %v450 = vpop.f32.mrb[0].mxu0
    %v451 = vadd.f32 %v366, %v450
    %v452 = vpop.f32.mrb[0].mxu0
    %v453 = vpop.f32.mrb[0].mxu0
    %v454 = vadd.f32 %v366, %v453
    %v455 = vpop.f32.mrb[0].mxu0
    %456 = vdwg.mxu0
    %v457 = vpack.c.bf16 %v454, %v451
    %v459 = vunpack.c.l.b16 %v457
    %v460 = vunpack.c.h.b16 %v457
    %v461 = vpack.c.b16 %v459, %v459
    %v462 = vpack.c.b16 %v460, %v460
    %vm465 = vcmask 519168
    %466 = vst.msk [vmem:[#allocation5] sm:$0xf] %vm465, %v461
    %467 = vst.msk [vmem:[#allocation5 + $0x4] sm:$0xf] %vm465, %v462
    // Predicated region
    $region42: #{tpu_custom_call.1} parent=1 // pred_check
      _
    $region43: #{tpu_custom_call.1} parent=1 // pred_check_branch
      %469 = sbr.rel (0) target = $region45
    $region44: #{tpu_custom_call.1} parent=1 // pred_region
      %s471 = ssub.s32 128, 128
      %472 = vsyncadd [#allocation4], %s471
      %s473 = sshll.u32 [#allocation5], 4
      %s474 = int_to_ptr.vmem [resolvable:$true] %s473
      %479 = dma.vmem_to_hbm [thread:$0]  %s474, 128, %s9, [#allocation4], 64, 64, 4
    $region45: #{tpu_custom_call.1} parent=1 // pred_fallthru
      _
    // Predicated region
    $region46: #{tpu_custom_call.1} parent=1 // pred_check
      _
    $region47: #{tpu_custom_call.1} parent=1 // pred_check_branch
      %481 = sbr.rel (0) target = $region49
    $region48: #{tpu_custom_call.1} parent=1 // pred_region
      %482 = dma.done [#allocation4], 128
    $region49: #{tpu_custom_call.1} parent=1 // pred_fallthru
      _
    %483 = vsyncpa [#allocation3], 1
    %484 = vsyncpa [#allocation4], 1

</llo_original>
